<compile_context>
chip_gen: v5e
topology: v5e:2x2
jax: 0.10.0
libtpu: 0.0.40
codegen_flags: <defaults>
</compile_context>

<pallas_src>
import functools

import jax
import jax.numpy as jnp
from jax import lax
from jax.experimental import pallas as pl
from jax.experimental.pallas import tpu as pltpu


def _round_up(x, m):
    return ((x + m - 1) // m) * m


# ----------------------------------------------------------------------------
# Fused per-episode kernel (grid=(b,), "parallel").
#   x_ref   : (Cin, L)        channel-major pixels of this episode
#                             (train cols [0, nt*HW), test cols [PT, PT+ns*HW),
#                              rest zero-padded; L = PT + PS, multiples of 128)
#   wb,bb   : (c, Cin), (c,1)  -- TODO(synk): resnet12() source not provided;
#             stand-in backbone = 1x1 conv + ReLU with these weights.
#   wc,bc   : (nCls, c), (nCls,1)  -- the nn.Conv2d(nFeat, num_classes, 1)
#   sel_ref : (L, nt+ns)  bf16 0/1 pixel->sample selector (spatial means)
#   y_ref   : (nt+ns, 2K) fp32 block-diag one-hots: [[ytrain,0],[0,ytest]]
# outputs:
#   logit_ref : (nCls, L)   classifier logits (channel-major)
#   score_ref : (nprot, L)  rows [0,K)=p-scores, [K,2K)=q-scores, rest zero
# ----------------------------------------------------------------------------
def _fused_episode_kernel(x_ref, wb_ref, bb_ref, wc_ref, bc_ref, sel_ref, y_ref,
                          logit_ref, score_ref, *, scale, inv_hw):
    # backbone stem (bf16 MXU operands, fp32 accumulation)
    xb = x_ref[...].astype(jnp.bfloat16)
    wb = wb_ref[...].astype(jnp.bfloat16)
    f = jnp.dot(wb, xb, preferred_element_type=jnp.float32) + bb_ref[...]
    f = jnp.maximum(f, 0.0)                                   # (c, L) fp32
    fb = f.astype(jnp.bfloat16)

    # 1x1-conv classifier on the resident feature slab
    wc = wc_ref[...].astype(jnp.bfloat16)
    logit_ref[...] = (jnp.dot(wc, fb, preferred_element_type=jnp.float32)
                      + bc_ref[...])

    # per-sample spatial means: bf16 0/1 selector matmul, 1/HW applied in fp32
    fm = jnp.dot(fb, sel_ref[...], preferred_element_type=jnp.float32) * inv_hw  # (c, nt+ns)

    # support (p) and query (q) prototypes in ONE tiny matmul; counts clamped
    y = y_ref[...]                                             # (nt+ns, 2K)
    cnt = jnp.maximum(jnp.sum(y, axis=0, keepdims=True), 1e-6)  # (1, 2K)
    pq = jnp.dot(fm, y, preferred_element_type=jnp.float32) / cnt  # (c, 2K)

    # channel-wise L2 normalization (matches F.normalize eps=1e-12)
    pq = pq * lax.rsqrt(jnp.maximum(jnp.sum(pq * pq, axis=0, keepdims=True), 1e-24))

    # stack/pad prototypes to `nprot` sublanes -> a single MXU push produces all
    # three score maps (p@xtr, q@xtr, p@xte) over the lane-dense (c, L) slab.
    pq = jnp.transpose(pq)                                     # (2K, c), tiny XLU
    pad_rows = score_ref.shape[0] - pq.shape[0]
    pq = jnp.concatenate(
        [pq, jnp.zeros((pad_rows, pq.shape[1]), jnp.float32)], axis=0)

    # per-position inverse feature norms (fp32), applied AFTER the matmul
    inv = lax.rsqrt(jnp.maximum(jnp.sum(f * f, axis=0, keepdims=True), 1e-24))  # (1, L)

    scores = jnp.dot(pq.astype(jnp.bfloat16), fb,
                     preferred_element_type=jnp.float32)        # (nprot, L)
    score_ref[...] = (scale * scores) * inv


def fused_forward(x, wb, bb, wc, bc, sel, y_ext, *, scale_cls, hw, nprot):
    b, cin, L = x.shape
    c = wb.shape[0]
    ncls = wc.shape[0]
    s = sel.shape[1]            # nt + ns
    k2 = y_ext.shape[2]         # 2K
    kernel = functools.partial(_fused_episode_kernel,
                               scale=float(scale_cls), inv_hw=1.0 / float(hw))
    return pl.pallas_call(
        kernel,
        out_shape=(
            jax.ShapeDtypeStruct((b, ncls, L), jnp.float32),
            jax.ShapeDtypeStruct((b, nprot, L), jnp.float32),
        ),
        grid=(b,),
        in_specs=[
            pl.BlockSpec((None, cin, L), lambda i: (i, 0, 0)),
            pl.BlockSpec((c, cin), lambda i: (0, 0)),
            pl.BlockSpec((c, 1), lambda i: (0, 0)),
            pl.BlockSpec((ncls, c), lambda i: (0, 0)),
            pl.BlockSpec((ncls, 1), lambda i: (0, 0)),
            pl.BlockSpec((L, s), lambda i: (0, 0)),
            pl.BlockSpec((None, s, k2), lambda i: (i, 0, 0)),
        ],
        out_specs=(
            pl.BlockSpec((None, ncls, L), lambda i: (i, 0, 0)),
            pl.BlockSpec((None, nprot, L), lambda i: (i, 0, 0)),
        ),
        compiler_params=pltpu.CompilerParams(dimension_semantics=("parallel",)),
    )(x, wb, bb, wc, bc, sel, y_ext)


# ----------------------------------------------------------------------------
# Model forward (training path), reproducing the PyTorch Model.forward.
# ----------------------------------------------------------------------------
@functools.partial(jax.jit, static_argnames=("scale_cls",))
def model_forward(params, xtrain, xtest, ytrain, ytest, scale_cls):
    b, nt = xtrain.shape[0], xtrain.shape[1]
    ns = xtest.shape[1]
    K = ytrain.shape[2]
    Cin, H, W = xtrain.shape[2], xtrain.shape[3], xtrain.shape[4]
    HW = H * W
    PT = _round_up(nt * HW, 128)
    PS = _round_up(ns * HW, 128)
    L = PT + PS
    nprot = _round_up(2 * K, 8)
    ncls = params["cls_w"].shape[0]
    c = params["base_w"].shape[0]

    # ---- lane-dense, lane-padded, channel-major per-episode input slab ------
    xtr = jnp.transpose(xtrain.reshape(b, nt, Cin, HW), (0, 2, 1, 3)).reshape(b, Cin, nt * HW)
    xte = jnp.transpose(xtest.reshape(b, ns, Cin, HW), (0, 2, 1, 3)).reshape(b, Cin, ns * HW)
    xtr = jnp.pad(xtr, ((0, 0), (0, 0), (0, PT - nt * HW)))
    xte = jnp.pad(xte, ((0, 0), (0, 0), (0, PS - ns * HW)))
    x = jnp.concatenate([xtr, xte], axis=2)                      # (b, Cin, L)

    # bf16 0/1 pixel -> sample spatial-mean selector (shared across episodes)
    sel_tr = jnp.kron(jnp.eye(nt, dtype=jnp.float32), jnp.ones((HW, 1), jnp.float32))
    sel_te = jnp.kron(jnp.eye(ns, dtype=jnp.float32), jnp.ones((HW, 1), jnp.float32))
    sel_tr = jnp.pad(sel_tr, ((0, PT - nt * HW), (0, 0)))        # (PT, nt)
    sel_te = jnp.pad(sel_te, ((0, PS - ns * HW), (0, 0)))        # (PS, ns)
    sel = jnp.concatenate(
        [jnp.concatenate([sel_tr, jnp.zeros((PT, ns), jnp.float32)], axis=1),
         jnp.concatenate([jnp.zeros((PS, nt), jnp.float32), sel_te], axis=1)],
        axis=0).astype(jnp.bfloat16)                              # (L, nt+ns)

    # block-diagonal one-hots: columns [0,K) = support classes, [K,2K) = query
    y_ext = jnp.concatenate(
        [jnp.concatenate([ytrain, jnp.zeros((b, nt, K), ytrain.dtype)], axis=2),
         jnp.concatenate([jnp.zeros((b, ns, K), ytest.dtype), ytest], axis=2)],
        axis=1)                                                   # (b, nt+ns, 2K)

    # ---- single fused pallas_call -------------------------------------------
    logits_cm, scores_cm = fused_forward(
        x, params["base_w"], params["base_b"].reshape(c, 1),
        params["cls_w"], params["cls_b"].reshape(ncls, 1),
        sel, y_ext, scale_cls=scale_cls, hw=HW, nprot=nprot)

    # TODO(synk): CCSAM() source is not provided; the stand-in is identity
    # attention, so cam outputs are broadcasts and the means/cosines computed
    # in-kernel on un-broadcast tensors are mathematically identical.

    # ---- crop / reshape to the PyTorch output layouts ------------------------
    lg_tr = logits_cm[:, :, :nt * HW].reshape(b, ncls, nt, HW)
    ytrain_out = jnp.transpose(lg_tr, (0, 2, 1, 3)).reshape(b * nt, ncls, H, W)
    lg_te = logits_cm[:, :, PT:PT + ns * HW].reshape(b, ncls, ns, HW)
    ytest_out = jnp.transpose(lg_te, (0, 2, 1, 3)).reshape(b * ns, ncls, H, W)
    # TODO(synk): with the identity-attention CCSAM stand-in the one-hot class
    # selection (torch.matmul(ftrain6/ftest, y)) is a no-op, so ytest_out == dd_out.
    dd_out = ytest_out

    s1 = scores_cm[:, 0:K, :nt * HW].reshape(b, K, nt, HW)
    cls_scores1 = jnp.transpose(s1, (0, 2, 1, 3)).reshape(b * nt, K, H, W)
    s2 = scores_cm[:, K:2 * K, :nt * HW].reshape(b, K, nt, HW)
    cls_scores2 = jnp.transpose(s2, (0, 2, 1, 3)).reshape(b * nt, K, H, W)
    ste = scores_cm[:, 0:K, PT:PT + ns * HW].reshape(b, K, ns, HW)
    cls_scores = jnp.transpose(ste, (0, 2, 1, 3)).reshape(b * ns, K, H, W)

    return ytest_out, ytrain_out, cls_scores, cls_scores1, cls_scores2, dd_out


# ----------------------------------------------------------------------------
# Pure-JAX reference (mirrors the same stand-ins / bf16 MXU operand precision)
# ----------------------------------------------------------------------------
def reference_forward(params, xtrain, xtest, ytrain, ytest, scale_cls):
    b, nt = xtrain.shape[0], xtrain.shape[1]
    ns = xtest.shape[1]
    K = ytrain.shape[2]
    Cin, H, W = xtrain.shape[2], xtrain.shape[3], xtrain.shape[4]
    HW = H * W

    def bf(v):  # mimic bf16 MXU inputs with fp32 accumulation
        return v.astype(jnp.bfloat16).astype(jnp.float32)

    x = jnp.concatenate([xtrain.reshape(b * nt, Cin, HW),
                         xtest.reshape(b * ns, Cin, HW)], axis=0)
    f = jnp.einsum("oc,ncp->nop", bf(params["base_w"]), bf(x)) + params["base_b"][None, :, None]
    f = jnp.maximum(f, 0.0)
    fb = bf(f)
    logits = jnp.einsum("oc,ncp->nop", bf(params["cls_w"]), fb) + params["cls_b"][None, :, None]
    c = f.shape[1]

    ftr, fte = f[:b * nt].reshape(b, nt, c, HW), f[b * nt:].reshape(b, ns, c, HW)
    ftr_b, fte_b = fb[:b * nt].reshape(b, nt, c, HW), fb[b * nt:].reshape(b, ns, c, HW)
    fm_tr = ftr_b.sum(-1) * (1.0 / HW)
    fm_te = fte_b.sum(-1) * (1.0 / HW)
    p = jnp.einsum("bnk,bnc->bkc", ytrain, fm_tr) / jnp.maximum(ytrain.sum(1), 1e-6)[..., None]
    q = jnp.einsum("bnk,bnc->bkc", ytest, fm_te) / jnp.maximum(ytest.sum(1), 1e-6)[..., None]

    def l2n(v, axis):
        return v * lax.rsqrt(jnp.maximum(jnp.sum(v * v, axis=axis, keepdims=True), 1e-24))

    p, q = l2n(p, -1), l2n(q, -1)
    inv_tr = lax.rsqrt(jnp.maximum(jnp.sum(ftr * ftr, axis=2, keepdims=True), 1e-24))
    inv_te = lax.rsqrt(jnp.maximum(jnp.sum(fte * fte, axis=2, keepdims=True), 1e-24))

    cls_scores = (scale_cls * jnp.einsum("bkc,bncp->bnkp", bf(p), fte_b) * inv_te
                  ).reshape(b * ns, K, H, W)
    cls_scores1 = (scale_cls * jnp.einsum("bkc,bncp->bnkp", bf(p), ftr_b) * inv_tr
                   ).reshape(b * nt, K, H, W)
    cls_scores2 = (scale_cls * jnp.einsum("bkc,bncp->bnkp", bf(q), ftr_b) * inv_tr
                   ).reshape(b * nt, K, H, W)
    logits = logits.reshape(-1, logits.shape[1], H, W)
    return (logits[b * nt:], logits[:b * nt],
            cls_scores, cls_scores1, cls_scores2, logits[b * nt:])


# ----------------------------------------------------------------------------
# Main
# ----------------------------------------------------------------------------
if __name__ == "__main__":
    key = jax.random.PRNGKey(0)
    k1, k2, k3, k4 = jax.random.split(key, 4)

    # small few-shot episode: batch=2, 5-way 1-shot, 5 query, 3x6x6 images
    b, nt, ns, K = 2, 5, 5, 5
    Cin, H, W = 3, 6, 6
    nFeat, num_classes = 32, 16
    scale_cls = 7.0

    xtrain = jax.random.normal(k1, (b, nt, Cin, H, W), dtype=jnp.float32)
    xtest = jax.random.normal(k2, (b, ns, Cin, H, W), dtype=jnp.float32)

    ytrain_lbl = jnp.tile(jnp.arange(K), (b, 1))
    ytest_lbl = jnp.tile(jnp.arange(K)[::-1], (b, 1))
    ytrain = jax.nn.one_hot(ytrain_lbl, K, dtype=jnp.float32)   # (b, nt, K)
    ytest = jax.nn.one_hot(ytest_lbl, K, dtype=jnp.float32)     # (b, ns, K)

    params = {
        "base_w": jax.random.normal(k3, (nFeat, Cin), dtype=jnp.float32) * (1.0 / jnp.sqrt(Cin)),
        "base_b": jnp.zeros((nFeat,), dtype=jnp.float32),
        "cls_w": jax.random.normal(k4, (num_classes, nFeat), dtype=jnp.float32) * (1.0 / jnp.sqrt(nFeat)),
        "cls_b": jnp.zeros((num_classes,), dtype=jnp.float32),
    }

    outs = model_forward(params, xtrain, xtest, ytrain, ytest, scale_cls=scale_cls)
    outs = jax.block_until_ready(outs)

    # shape fidelity vs the PyTorch module
    assert outs[0].shape == (b * ns, num_classes, H, W)
    assert outs[1].shape == (b * nt, num_classes, H, W)
    assert outs[2].shape == (b * ns, K, H, W)
    assert outs[3].shape == (b * nt, K, H, W)
    assert outs[4].shape == (b * nt, K, H, W)
    assert outs[5].shape == (b * ns, num_classes, H, W)

    # numerical check against the pure-JAX reference
    refs = reference_forward(params, xtrain, xtest, ytrain, ytest, scale_cls)
    for o, r in zip(outs, refs):
        err = float(jnp.max(jnp.abs(o - r)))
        assert err < 5e-2, f"mismatch vs reference: max abs err {err}"

    print("KERNEL_OK")
</pallas_src>

<mosaic_0001>
module attributes {stable_mosaic.version = 11 : i64} {
  func.func @_fused_episode_kernel(%arg0: i32, %arg1: memref<1x3x512xf32, #tpu.memory_space<vmem>>, %arg2: memref<32x3xf32, #tpu.memory_space<vmem>>, %arg3: memref<32x1xf32, #tpu.memory_space<vmem>>, %arg4: memref<16x32xf32, #tpu.memory_space<vmem>>, %arg5: memref<16x1xf32, #tpu.memory_space<vmem>>, %arg6: memref<512x10xbf16, #tpu.memory_space<vmem>>, %arg7: memref<1x10x10xf32, #tpu.memory_space<vmem>>, %arg8: memref<1x16x512xf32, #tpu.memory_space<vmem>>, %arg9: memref<1x16x512xf32, #tpu.memory_space<vmem>>) attributes {dimension_semantics = [#tpu.dimension_semantics<parallel>], iteration_bounds = array<i64: 2>, scalar_prefetch = 0 : i64, scratch_operands = 0 : i64, tpu.core_type = #tpu.core_type<tc>, window_params = [{transform_indices = @transform_0, window_bounds = array<i64: 1, 3, 512>}, {pipeline_mode = #tpu.pipeline_mode<synchronous>, transform_indices = @transform_1, window_bounds = array<i64: 32, 3>}, {pipeline_mode = #tpu.pipeline_mode<synchronous>, transform_indices = @transform_2, window_bounds = array<i64: 32, 1>}, {pipeline_mode = #tpu.pipeline_mode<synchronous>, transform_indices = @transform_3, window_bounds = array<i64: 16, 32>}, {pipeline_mode = #tpu.pipeline_mode<synchronous>, transform_indices = @transform_4, window_bounds = array<i64: 16, 1>}, {pipeline_mode = #tpu.pipeline_mode<synchronous>, transform_indices = @transform_5, window_bounds = array<i64: 512, 10>}, {transform_indices = @transform_6, window_bounds = array<i64: 1, 10, 10>}, {transform_indices = @transform_7, window_bounds = array<i64: 1, 16, 512>}, {transform_indices = @transform_8, window_bounds = array<i64: 1, 16, 512>}]} {
    %c0 = arith.constant 0 : index
    %c0_0 = arith.constant 0 : index
    %c0_1 = arith.constant 0 : index
    %0 = vector.load %arg1[%c0, %c0_0, %c0_1] : memref<1x3x512xf32, #tpu.memory_space<vmem>>, vector<1x3x512xf32>
    %1 = vector.shape_cast %0 : vector<1x3x512xf32> to vector<3x512xf32>
    %2 = arith.truncf %1 : vector<3x512xf32> to vector<3x512xbf16>
    %c0_2 = arith.constant 0 : index
    %c0_3 = arith.constant 0 : index
    %3 = vector.load %arg2[%c0_2, %c0_3] : memref<32x3xf32, #tpu.memory_space<vmem>>, vector<32x3xf32>
    %4 = arith.truncf %3 : vector<32x3xf32> to vector<32x3xbf16>
    %cst = arith.constant dense<0.000000e+00> : vector<32x512xf32>
    %5 = tpu.matmul %4, %2, %cst {dimension_numbers = #tpu.dot_dimension_numbers<[1], [0], [0], [1], [0, 0, 1, 1], [], []>} : vector<32x3xbf16>, vector<3x512xbf16>, vector<32x512xf32> -> vector<32x512xf32>
    %c0_4 = arith.constant 0 : index
    %c0_5 = arith.constant 0 : index
    %6 = vector.load %arg3[%c0_4, %c0_5] : memref<32x1xf32, #tpu.memory_space<vmem>>, vector<32x1xf32>
    %7 = vector.broadcast %6 : vector<32x1xf32> to vector<32x512xf32>
    %8 = arith.addf %5, %7 : vector<32x512xf32>
    %cst_6 = arith.constant 0.000000e+00 : f32
    %9 = vector.broadcast %cst_6 : f32 to vector<32x512xf32>
    %10 = arith.maximumf %8, %9 : vector<32x512xf32>
    %11 = arith.truncf %10 : vector<32x512xf32> to vector<32x512xbf16>
    %c0_7 = arith.constant 0 : index
    %c0_8 = arith.constant 0 : index
    %12 = vector.load %arg4[%c0_7, %c0_8] : memref<16x32xf32, #tpu.memory_space<vmem>>, vector<16x32xf32>
    %13 = arith.truncf %12 : vector<16x32xf32> to vector<16x32xbf16>
    %cst_9 = arith.constant dense<0.000000e+00> : vector<16x512xf32>
    %14 = tpu.matmul %13, %11, %cst_9 {dimension_numbers = #tpu.dot_dimension_numbers<[1], [0], [0], [1], [0, 0, 1, 1], [], []>} : vector<16x32xbf16>, vector<32x512xbf16>, vector<16x512xf32> -> vector<16x512xf32>
    %c0_10 = arith.constant 0 : index
    %c0_11 = arith.constant 0 : index
    %15 = vector.load %arg5[%c0_10, %c0_11] : memref<16x1xf32, #tpu.memory_space<vmem>>, vector<16x1xf32>
    %16 = vector.broadcast %15 : vector<16x1xf32> to vector<16x512xf32>
    %17 = arith.addf %14, %16 : vector<16x512xf32>
    %c0_12 = arith.constant 0 : index
    %c0_13 = arith.constant 0 : index
    %c0_14 = arith.constant 0 : index
    %18 = vector.load %arg8[%c0_12, %c0_13, %c0_14] : memref<1x16x512xf32, #tpu.memory_space<vmem>>, vector<1x16x512xf32>
    %19 = vector.shape_cast %18 : vector<1x16x512xf32> to vector<16x512xf32>
    %20 = vector.shape_cast %17 : vector<16x512xf32> to vector<1x16x512xf32>
    tpu.vector_store %arg8[%c0_12, %c0_13, %c0_14], %20 {strides = array<i32>} : memref<1x16x512xf32, #tpu.memory_space<vmem>>, vector<1x16x512xf32>,
    %c0_15 = arith.constant 0 : index
    %c0_16 = arith.constant 0 : index
    %21 = vector.load %arg6[%c0_15, %c0_16] : memref<512x10xbf16, #tpu.memory_space<vmem>>, vector<512x10xbf16>
    %cst_17 = arith.constant dense<0.000000e+00> : vector<32x10xf32>
    %22 = tpu.matmul %11, %21, %cst_17 {dimension_numbers = #tpu.dot_dimension_numbers<[1], [0], [0], [1], [0, 0, 1, 1], [], []>} : vector<32x512xbf16>, vector<512x10xbf16>, vector<32x10xf32> -> vector<32x10xf32>
    %cst_18 = arith.constant 0.027777778 : f32
    %23 = vector.broadcast %cst_18 : f32 to vector<32x10xf32>
    %24 = arith.mulf %22, %23 : vector<32x10xf32>
    %c0_19 = arith.constant 0 : index
    %c0_20 = arith.constant 0 : index
    %c0_21 = arith.constant 0 : index
    %25 = vector.load %arg7[%c0_19, %c0_20, %c0_21] : memref<1x10x10xf32, #tpu.memory_space<vmem>>, vector<1x10x10xf32>
    %26 = vector.shape_cast %25 : vector<1x10x10xf32> to vector<10x10xf32>
    %cst_22 = arith.constant dense<0.000000e+00> : vector<10xf32>
    %27 = vector.multi_reduction <add>, %26, %cst_22 [0] : vector<10x10xf32> to vector<10xf32>
    %28 = vector.shape_cast %27 : vector<10xf32> to vector<1x10xf32>
    %cst_23 = arith.constant 9.99999997E-7 : f32
    %29 = vector.broadcast %cst_23 : f32 to vector<1x10xf32>
    %30 = arith.maximumf %28, %29 : vector<1x10xf32>
    %cst_24 = arith.constant dense<0.000000e+00> : vector<32x10xf32>
    %31 = tpu.matmul %24, %26, %cst_24 {dimension_numbers = #tpu.dot_dimension_numbers<[1], [0], [0], [1], [0, 0, 1, 1], [], []>} : vector<32x10xf32>, vector<10x10xf32>, vector<32x10xf32> -> vector<32x10xf32>
    %32 = vector.broadcast %30 : vector<1x10xf32> to vector<32x10xf32>
    %33 = arith.divf %31, %32 : vector<32x10xf32>
    %34 = arith.mulf %33, %33 : vector<32x10xf32>
    %cst_25 = arith.constant dense<0.000000e+00> : vector<10xf32>
    %35 = vector.multi_reduction <add>, %34, %cst_25 [0] : vector<32x10xf32> to vector<10xf32>
    %36 = vector.shape_cast %35 : vector<10xf32> to vector<1x10xf32>
    %cst_26 = arith.constant 1.000000e-24 : f32
    %37 = vector.broadcast %cst_26 : f32 to vector<1x10xf32>
    %38 = arith.maximumf %36, %37 : vector<1x10xf32>
    %39 = math.rsqrt %38 : vector<1x10xf32>
    %40 = vector.broadcast %39 : vector<1x10xf32> to vector<32x10xf32>
    %41 = arith.mulf %33, %40 : vector<32x10xf32>
    %42 = tpu.transpose %41, [1, 0] : vector<32x10xf32> -> vector<10x32xf32>
    %cst_27 = arith.constant 0.000000e+00 : f32
    %43 = vector.broadcast %cst_27 : f32 to vector<6x32xf32>
    %44 = tpu.concatenate %42, %43 in 0 : vector<10x32xf32>, vector<6x32xf32> -> vector<16x32xf32>
    %45 = arith.mulf %10, %10 : vector<32x512xf32>
    %cst_28 = arith.constant dense<0.000000e+00> : vector<512xf32>
    %46 = vector.multi_reduction <add>, %45, %cst_28 [0] : vector<32x512xf32> to vector<512xf32>
    %47 = vector.shape_cast %46 : vector<512xf32> to vector<1x512xf32>
    %cst_29 = arith.constant 1.000000e-24 : f32
    %48 = vector.broadcast %cst_29 : f32 to vector<1x512xf32>
    %49 = arith.maximumf %47, %48 : vector<1x512xf32>
    %50 = math.rsqrt %49 : vector<1x512xf32>
    %51 = arith.truncf %44 : vector<16x32xf32> to vector<16x32xbf16>
    %cst_30 = arith.constant dense<0.000000e+00> : vector<16x512xf32>
    %52 = tpu.matmul %51, %11, %cst_30 {dimension_numbers = #tpu.dot_dimension_numbers<[1], [0], [0], [1], [0, 0, 1, 1], [], []>} : vector<16x32xbf16>, vector<32x512xbf16>, vector<16x512xf32> -> vector<16x512xf32>
    %cst_31 = arith.constant 7.000000e+00 : f32
    %53 = vector.broadcast %cst_31 : f32 to vector<16x512xf32>
    %54 = arith.mulf %53, %52 : vector<16x512xf32>
    %55 = vector.broadcast %50 : vector<1x512xf32> to vector<16x512xf32>
    %56 = arith.mulf %54, %55 : vector<16x512xf32>
    %c0_32 = arith.constant 0 : index
    %c0_33 = arith.constant 0 : index
    %c0_34 = arith.constant 0 : index
    %57 = vector.load %arg9[%c0_32, %c0_33, %c0_34] : memref<1x16x512xf32, #tpu.memory_space<vmem>>, vector<1x16x512xf32>
    %58 = vector.shape_cast %57 : vector<1x16x512xf32> to vector<16x512xf32>
    %59 = vector.shape_cast %56 : vector<16x512xf32> to vector<1x16x512xf32>
    tpu.vector_store %arg9[%c0_32, %c0_33, %c0_34], %59 {strides = array<i32>} : memref<1x16x512xf32, #tpu.memory_space<vmem>>, vector<1x16x512xf32>,
    return
  }
  func.func @transform_0(%arg0: i32) -> (i32, i32, i32) {
    %c0_i32 = arith.constant 0 : i32
    %c0_i32_0 = arith.constant 0 : i32
    %c0_i32_1 = arith.constant 0 : i32
    return %arg0, %c0_i32, %c0_i32_0 : i32, i32, i32
  }
  func.func @transform_1(%arg0: i32) -> (i32, i32) {
    %c0_i32 = arith.constant 0 : i32
    %c0_i32_0 = arith.constant 0 : i32
    %c0_i32_1 = arith.constant 0 : i32
    return %c0_i32, %c0_i32_0 : i32, i32
  }
  func.func @transform_2(%arg0: i32) -> (i32, i32) {
    %c0_i32 = arith.constant 0 : i32
    %c0_i32_0 = arith.constant 0 : i32
    %c0_i32_1 = arith.constant 0 : i32
    return %c0_i32, %c0_i32_0 : i32, i32
  }
  func.func @transform_3(%arg0: i32) -> (i32, i32) {
    %c0_i32 = arith.constant 0 : i32
    %c0_i32_0 = arith.constant 0 : i32
    %c0_i32_1 = arith.constant 0 : i32
    return %c0_i32, %c0_i32_0 : i32, i32
  }
  func.func @transform_4(%arg0: i32) -> (i32, i32) {
    %c0_i32 = arith.constant 0 : i32
    %c0_i32_0 = arith.constant 0 : i32
    %c0_i32_1 = arith.constant 0 : i32
    return %c0_i32, %c0_i32_0 : i32, i32
  }
  func.func @transform_5(%arg0: i32) -> (i32, i32) {
    %c0_i32 = arith.constant 0 : i32
    %c0_i32_0 = arith.constant 0 : i32
    %c0_i32_1 = arith.constant 0 : i32
    return %c0_i32, %c0_i32_0 : i32, i32
  }
  func.func @transform_6(%arg0: i32) -> (i32, i32, i32) {
    %c0_i32 = arith.constant 0 : i32
    %c0_i32_0 = arith.constant 0 : i32
    %c0_i32_1 = arith.constant 0 : i32
    return %arg0, %c0_i32, %c0_i32_0 : i32, i32, i32
  }
  func.func @transform_7(%arg0: i32) -> (i32, i32, i32) {
    %c0_i32 = arith.constant 0 : i32
    %c0_i32_0 = arith.constant 0 : i32
    %c0_i32_1 = arith.constant 0 : i32
    return %arg0, %c0_i32, %c0_i32_0 : i32, i32, i32
  }
  func.func @transform_8(%arg0: i32) -> (i32, i32, i32) {
    %c0_i32 = arith.constant 0 : i32
    %c0_i32_0 = arith.constant 0 : i32
    %c0_i32_1 = arith.constant 0 : i32
    return %arg0, %c0_i32, %c0_i32_0 : i32, i32, i32
  }
}

</mosaic_0001>

<llo_original>
// kernel: model_forward.1
$region0: #{model_forward.1}
  #allocation0 [shape = 'u32[]', space=smem, size = 0x4, offset = 0x4, fixed_abs, tag = 'smem constant byte address 0x4 - core index']
  #allocation1 [shape = 'u32[72,128]{1,0:T(1,128)}', space=vmem, size = 0x9000, scoped, tag = 'internal scratch']
  %s0 = inlined_call_operand.vmem [shape: f32[2,3,512], index: 0, kind: input, shape index: {}]
  %s1 = inlined_call_operand.vmem [shape: f32[32,3], index: 1, kind: input, shape index: {}]
  %s2 = inlined_call_operand.vmem [shape: f32[32,1], index: 2, kind: input, shape index: {}]
  %s3 = inlined_call_operand.vmem [shape: f32[16,32], index: 3, kind: input, shape index: {}]
  %s4 = inlined_call_operand.vmem [shape: f32[16,1], index: 4, kind: input, shape index: {}]
  %s5 = inlined_call_operand.vmem [shape: bf16[512,10], index: 5, kind: input, shape index: {}]
  %s6 = inlined_call_operand.vmem [shape: f32[2,10,10], index: 6, kind: input, shape index: {}]
  %s7 = inlined_call_operand.vmem [shape: f32[2,16,512], index: 7, kind: output, shape index: {0}]
  %s8 = inlined_call_operand.vmem [shape: f32[2,16,512], index: 8, kind: output, shape index: {1}]
  %9 = xla_tuple %s7, %s8
  %s10 = sld [smem:[#allocation0]]
  $region69: #{model_forward.1} parent=0
    _
  %s12 = ssub.s32 1, %s10
  %s13 = scalar_select 0, %s12, %s10
  loop: start=0, step=1, limit=4
  $region2: #{model_forward.1} parent=0 // loop_pre_header
    _
  $region3: #{model_forward.1} parent=0 // loop_header
    %s15 = sphi 0, %s19
    %p16 = scmp.ge.s32.totalorder %s15, 4
    %s25 = sphi 0, %s27
    %s28 = sphi 0, %s25
    %s29 = sphi 0, %s28
    %s45 = sphi 0, %s29
    %s49 = sphi 0, %s49
    %s51 = sphi 0, %s49
    %s52 = sphi 0, %s51
    %s66 = sphi 0, %s52
    %s70 = sphi 0, %s70
    %s72 = sphi 0, %s70
    %s73 = sphi 0, %s72
    %s87 = sphi 0, %s73
    %s91 = sphi 0, %s91
    %s93 = sphi 0, %s91
    %s94 = sphi 0, %s93
    %s108 = sphi 0, %s94
    %s112 = sphi 0, %s112
    %s114 = sphi 0, %s112
    %s115 = sphi 0, %s114
    %s129 = sphi 0, %s115
    %s133 = sphi 0, %s133
    %s135 = sphi 0, %s133
    %s136 = sphi 0, %s135
    %s150 = sphi 0, %s136
    %s156 = sphi 0, %s158
    %s159 = sphi 0, %s156
    %s160 = sphi 0, %s159
    %s176 = sphi 0, %s160
    %s182 = sphi 0, %s184
    %s185 = sphi 0, %s182
    %s186 = sphi 0, %s185
    %s202 = sphi 0, %s186
    %s208 = sphi 0, %s210
    %s211 = sphi 0, %s208
    %s212 = sphi 0, %s211
    %s228 = sphi 0, %s212
  $region4: #{model_forward.1} parent=0 // loop_header_branch
    %18 = sbr.rel (%p16) target = $region8
  $region5: #{model_forward.1} parent=0 // loop_body
    %s20 = ssub.s32 %s15, 1
    %s21 = ssub.s32 %s15, 2
    %s22 = sadd.s32 %s15, 1
    %s23 = ssub.s32 %s15, %s22
    %p24 = scmp.eq.s32.totalorder %s23, 0
    %s26 = sadd.s32 %s25, 1
    %s27 = scalar_select %p24, %s25, %s26
    %p30 = pneg %p24
    %p31 = scmp.eq.s32.totalorder %s15, 1
    %p32 = por %p30, %p31
    %p33 = scmp.ne.s32.totalorder %s25, %s28
    %p34 = scmp.eq.s32.totalorder %s15, 0
    %p35 = por %p33, %p34
    %p36 = scmp.ne.s32.totalorder %s25, %s28
    %p37 = scmp.eq.s32.totalorder %s20, 1
    %p38 = por %p36, %p37
    %p39 = scmp.ne.s32.totalorder %s28, %s29
    %p40 = scmp.eq.s32.totalorder %s20, 0
    %p41 = por %p39, %p40
    %p42 = scmp.ne.s32.totalorder %s28, %s29
    %p43 = scmp.eq.s32.totalorder %s21, 1
    %p44 = por %p42, %p43
    %p46 = scmp.ne.s32.totalorder %s29, %s45
    %p47 = scmp.eq.s32.totalorder %s21, 0
    %p48 = por %p46, %p47
    %s50 = sadd.s32 %s49, 1
    %p53 = scmp.eq.s32.totalorder %s15, 1
    %p54 = scmp.ne.s32.totalorder %s49, %s51
    %p55 = scmp.eq.s32.totalorder %s15, 0
    %p56 = por %p54, %p55
    %p57 = scmp.ne.s32.totalorder %s49, %s51
    %p58 = scmp.eq.s32.totalorder %s20, 1
    %p59 = por %p57, %p58
    %p60 = scmp.ne.s32.totalorder %s51, %s52
    %p61 = scmp.eq.s32.totalorder %s20, 0
    %p62 = por %p60, %p61
    %p63 = scmp.ne.s32.totalorder %s51, %s52
    %p64 = scmp.eq.s32.totalorder %s21, 1
    %p65 = por %p63, %p64
    %p67 = scmp.ne.s32.totalorder %s52, %s66
    %p68 = scmp.eq.s32.totalorder %s21, 0
    %p69 = por %p67, %p68
    %s71 = sadd.s32 %s70, 1
    %p74 = scmp.eq.s32.totalorder %s15, 1
    %p75 = scmp.ne.s32.totalorder %s70, %s72
    %p76 = scmp.eq.s32.totalorder %s15, 0
    %p77 = por %p75, %p76
    %p78 = scmp.ne.s32.totalorder %s70, %s72
    %p79 = scmp.eq.s32.totalorder %s20, 1
    %p80 = por %p78, %p79
    %p81 = scmp.ne.s32.totalorder %s72, %s73
    %p82 = scmp.eq.s32.totalorder %s20, 0
    %p83 = por %p81, %p82
    %p84 = scmp.ne.s32.totalorder %s72, %s73
    %p85 = scmp.eq.s32.totalorder %s21, 1
    %p86 = por %p84, %p85
    %p88 = scmp.ne.s32.totalorder %s73, %s87
    %p89 = scmp.eq.s32.totalorder %s21, 0
    %p90 = por %p88, %p89
    %s92 = sadd.s32 %s91, 1
    %p95 = scmp.eq.s32.totalorder %s15, 1
    %p96 = scmp.ne.s32.totalorder %s91, %s93
    %p97 = scmp.eq.s32.totalorder %s15, 0
    %p98 = por %p96, %p97
    %p99 = scmp.ne.s32.totalorder %s91, %s93
    %p100 = scmp.eq.s32.totalorder %s20, 1
    %p101 = por %p99, %p100
    %p102 = scmp.ne.s32.totalorder %s93, %s94
    %p103 = scmp.eq.s32.totalorder %s20, 0
    %p104 = por %p102, %p103
    %p105 = scmp.ne.s32.totalorder %s93, %s94
    %p106 = scmp.eq.s32.totalorder %s21, 1
    %p107 = por %p105, %p106
    %p109 = scmp.ne.s32.totalorder %s94, %s108
    %p110 = scmp.eq.s32.totalorder %s21, 0
    %p111 = por %p109, %p110
    %s113 = sadd.s32 %s112, 1
    %p116 = scmp.eq.s32.totalorder %s15, 1
    %p117 = scmp.ne.s32.totalorder %s112, %s114
    %p118 = scmp.eq.s32.totalorder %s15, 0
    %p119 = por %p117, %p118
    %p120 = scmp.ne.s32.totalorder %s112, %s114
    %p121 = scmp.eq.s32.totalorder %s20, 1
    %p122 = por %p120, %p121
    %p123 = scmp.ne.s32.totalorder %s114, %s115
    %p124 = scmp.eq.s32.totalorder %s20, 0
    %p125 = por %p123, %p124
    %p126 = scmp.ne.s32.totalorder %s114, %s115
    %p127 = scmp.eq.s32.totalorder %s21, 1
    %p128 = por %p126, %p127
    %p130 = scmp.ne.s32.totalorder %s115, %s129
    %p131 = scmp.eq.s32.totalorder %s21, 0
    %p132 = por %p130, %p131
    %s134 = sadd.s32 %s133, 1
    %p137 = scmp.eq.s32.totalorder %s15, 1
    %p138 = scmp.ne.s32.totalorder %s133, %s135
    %p139 = scmp.eq.s32.totalorder %s15, 0
    %p140 = por %p138, %p139
    %p141 = scmp.ne.s32.totalorder %s133, %s135
    %p142 = scmp.eq.s32.totalorder %s20, 1
    %p143 = por %p141, %p142
    %p144 = scmp.ne.s32.totalorder %s135, %s136
    %p145 = scmp.eq.s32.totalorder %s20, 0
    %p146 = por %p144, %p145
    %p147 = scmp.ne.s32.totalorder %s135, %s136
    %p148 = scmp.eq.s32.totalorder %s21, 1
    %p149 = por %p147, %p148
    %p151 = scmp.ne.s32.totalorder %s136, %s150
    %p152 = scmp.eq.s32.totalorder %s21, 0
    %p153 = por %p151, %p152
    %s154 = ssub.s32 %s15, %s22
    %p155 = scmp.eq.s32.totalorder %s154, 0
    %s157 = sadd.s32 %s156, 1
    %s158 = scalar_select %p155, %s156, %s157
    %p161 = pneg %p155
    %p162 = scmp.eq.s32.totalorder %s15, 1
    %p163 = por %p161, %p162
    %p164 = scmp.ne.s32.totalorder %s156, %s159
    %p165 = scmp.eq.s32.totalorder %s15, 0
    %p166 = por %p164, %p165
    %p167 = scmp.ne.s32.totalorder %s156, %s159
    %p168 = scmp.eq.s32.totalorder %s20, 1
    %p169 = por %p167, %p168
    %p170 = scmp.ne.s32.totalorder %s159, %s160
    %p171 = scmp.eq.s32.totalorder %s20, 0
    %p172 = por %p170, %p171
    %p173 = scmp.ne.s32.totalorder %s159, %s160
    %p174 = scmp.eq.s32.totalorder %s21, 1
    %p175 = por %p173, %p174
    %p177 = scmp.ne.s32.totalorder %s160, %s176
    %p178 = scmp.eq.s32.totalorder %s21, 0
    %p179 = por %p177, %p178
    %s180 = ssub.s32 %s15, %s22
    %p181 = scmp.eq.s32.totalorder %s180, 0
    %s183 = sadd.s32 %s182, 1
    %s184 = scalar_select %p181, %s182, %s183
    %p187 = pneg %p181
    %p188 = scmp.eq.s32.totalorder %s15, 1
    %p189 = por %p187, %p188
    %p190 = scmp.ne.s32.totalorder %s182, %s185
    %p191 = scmp.eq.s32.totalorder %s15, 0
    %p192 = por %p190, %p191
    %p193 = scmp.ne.s32.totalorder %s182, %s185
    %p194 = scmp.eq.s32.totalorder %s20, 1
    %p195 = por %p193, %p194
    %p196 = scmp.ne.s32.totalorder %s185, %s186
    %p197 = scmp.eq.s32.totalorder %s20, 0
    %p198 = por %p196, %p197
    %p199 = scmp.ne.s32.totalorder %s185, %s186
    %p200 = scmp.eq.s32.totalorder %s21, 1
    %p201 = por %p199, %p200
    %p203 = scmp.ne.s32.totalorder %s186, %s202
    %p204 = scmp.eq.s32.totalorder %s21, 0
    %p205 = por %p203, %p204
    %s206 = ssub.s32 %s15, %s22
    %p207 = scmp.eq.s32.totalorder %s206, 0
    %s209 = sadd.s32 %s208, 1
    %s210 = scalar_select %p207, %s208, %s209
    %p213 = pneg %p207
    %p214 = scmp.eq.s32.totalorder %s15, 1
    %p215 = por %p213, %p214
    %p216 = scmp.ne.s32.totalorder %s208, %s211
    %p217 = scmp.eq.s32.totalorder %s15, 0
    %p218 = por %p216, %p217
    %p219 = scmp.ne.s32.totalorder %s208, %s211
    %p220 = scmp.eq.s32.totalorder %s20, 1
    %p221 = por %p219, %p220
    %p222 = scmp.ne.s32.totalorder %s211, %s212
    %p223 = scmp.eq.s32.totalorder %s20, 0
    %p224 = por %p222, %p223
    %p225 = scmp.ne.s32.totalorder %s211, %s212
    %p226 = scmp.eq.s32.totalorder %s21, 1
    %p227 = por %p225, %p226
    %p229 = scmp.ne.s32.totalorder %s212, %s228
    %p230 = scmp.eq.s32.totalorder %s21, 0
    %p231 = por %p229, %p230
    %p232 = scmp.le.s32.totalorder 1, %s15
    %p233 = scmp.lt.s32.totalorder %s15, 3
    %p234 = pnand %p232, %p233
    %p235 = pneg %p234
    // Predicated region
    $region9: #{model_forward.1} parent=5 // pred_check
      _
    $region10: #{model_forward.1} parent=5 // pred_check_branch
      %237 = sbr.rel (%p234) target = $region12
    $region11: #{model_forward.1} parent=5 // pred_region
      %s238 = ssub.s32 %s15, 1
      // Predicated region
      $region13: #{model_forward.1} parent=11 // pred_check
        %p239 = pneg %p62
      $region14: #{model_forward.1} parent=11 // pred_check_branch
        %241 = sbr.rel (%p239) target = $region16
      $region15: #{model_forward.1} parent=11 // pred_region
        _
      $region16: #{model_forward.1} parent=11 // pred_fallthru
        _
      // Predicated region
      $region17: #{model_forward.1} parent=11 // pred_check
        %p242 = pneg %p83
      $region18: #{model_forward.1} parent=11 // pred_check_branch
        %244 = sbr.rel (%p242) target = $region20
      $region19: #{model_forward.1} parent=11 // pred_region
        _
      $region20: #{model_forward.1} parent=11 // pred_fallthru
        _
      // Predicated region
      $region21: #{model_forward.1} parent=11 // pred_check
        %p245 = pneg %p104
      $region22: #{model_forward.1} parent=11 // pred_check_branch
        %247 = sbr.rel (%p245) target = $region24
      $region23: #{model_forward.1} parent=11 // pred_region
        _
      $region24: #{model_forward.1} parent=11 // pred_fallthru
        _
      // Predicated region
      $region25: #{model_forward.1} parent=11 // pred_check
        %p248 = pneg %p125
      $region26: #{model_forward.1} parent=11 // pred_check_branch
        %250 = sbr.rel (%p248) target = $region28
      $region27: #{model_forward.1} parent=11 // pred_region
        _
      $region28: #{model_forward.1} parent=11 // pred_fallthru
        _
      // Predicated region
      $region29: #{model_forward.1} parent=11 // pred_check
        %p251 = pneg %p146
      $region30: #{model_forward.1} parent=11 // pred_check_branch
        %253 = sbr.rel (%p251) target = $region32
      $region31: #{model_forward.1} parent=11 // pred_region
        _
      $region32: #{model_forward.1} parent=11 // pred_fallthru
        _
    $region12: #{model_forward.1} parent=5 // pred_fallthru
      _
    %p254 = scmp.lt.s32.totalorder %s15, 2
    // Predicated region
    $region33: #{model_forward.1} parent=5 // pred_check
      %p255 = pneg %p254
    $region34: #{model_forward.1} parent=5 // pred_check_branch
      %257 = sbr.rel (%p255) target = $region36
    $region35: #{model_forward.1} parent=5 // pred_region
      // Predicated region
      $region37: #{model_forward.1} parent=35 // pred_check
        %p258 = pneg %p35
      $region38: #{model_forward.1} parent=35 // pred_check_branch
        %260 = sbr.rel (%p258) target = $region40
      $region39: #{model_forward.1} parent=35 // pred_region
        %p261 = scmp.lt.s32.totalorder %s15, 1
        %s262 = scalar_select %p261, %s15, 1
        %s263 = smul.addr %s262, 4
        %s264 = smul.addr %s263, 4
        %s265 = scalar_lea.vmem %s0, %s264
      $region40: #{model_forward.1} parent=35 // pred_fallthru
        _
      // Predicated region
      $region41: #{model_forward.1} parent=35 // pred_check
        %p266 = pneg %p166
      $region42: #{model_forward.1} parent=35 // pred_check_branch
        %268 = sbr.rel (%p266) target = $region44
      $region43: #{model_forward.1} parent=35 // pred_region
        %p269 = scmp.lt.s32.totalorder %s15, 1
        %s270 = scalar_select %p269, %s15, 1
        %s271 = smul.addr %s270, 2
        %s272 = smul.addr %s271, 8
        %s273 = scalar_lea.vmem %s6, %s272
      $region44: #{model_forward.1} parent=35 // pred_fallthru
        _
    $region36: #{model_forward.1} parent=5 // pred_fallthru
      _
    %p274 = scmp.le.s32.totalorder 1, %s15
    %p275 = scmp.lt.s32.totalorder %s15, 3
    %p276 = pnand %p274, %p275
    %p277 = pneg %p276
    // Predicated region
    $region45: #{model_forward.1} parent=5 // pred_check
      _
    $region46: #{model_forward.1} parent=5 // pred_check_branch
      %279 = sbr.rel (%p276) target = $region48
    $region47: #{model_forward.1} parent=5 // pred_region
      %s280 = ssub.s32 %s15, 1
      %p281 = scmp.lt.s32.totalorder %s20, 1
      %s282 = scalar_select %p281, %s20, 1
      %s283 = smul.addr %s282, 4
      %s284 = smul.addr %s283, 4
      %s285 = scalar_lea.vmem %s0, %s284
      %p286 = pneg %p41
      %p287 = pneg %p38
      %p288 = pneg %p62
      %p289 = pneg %p59
      %p290 = pneg %p83
      %p291 = pneg %p80
      %p292 = pneg %p104
      %p293 = pneg %p101
      %p294 = pneg %p125
      %p295 = pneg %p122
      %p296 = pneg %p146
      %p297 = pneg %p143
      %p298 = scmp.lt.s32.totalorder %s20, 1
      %s299 = scalar_select %p298, %s20, 1
      %s300 = smul.addr %s299, 2
      %s301 = smul.addr %s300, 8
      %s302 = scalar_lea.vmem %s6, %s301
      %p303 = pneg %p172
      %p304 = pneg %p169
      %p305 = pneg %p198
      %p306 = pneg %p195
      %p307 = scmp.lt.s32.totalorder %s20, 1
      %s308 = scalar_select %p307, %s20, 1
      %s309 = smul.addr %s308, 8
      %s310 = smul.addr %s309, 8
      %s311 = scalar_lea.vmem %s7, %s310
      %p312 = pneg %p224
      %p313 = pneg %p221
      %p314 = scmp.lt.s32.totalorder %s20, 1
      %s315 = scalar_select %p314, %s20, 1
      %s316 = smul.addr %s315, 8
      %s317 = smul.addr %s316, 8
      %s318 = scalar_lea.vmem %s8, %s317
      %p319 = scmp.lt.s32.totalorder %s20, 1
      %s320 = scalar_select %p319, %s20, 1
      %s321 = smul.addr %s320, 4
      %s322 = smul.addr %s321, 4
      %s323 = scalar_lea.vmem %s0, %s322
      %p324 = scmp.lt.s32.totalorder %s20, 1
      %s325 = scalar_select %p324, %s20, 1
      %s326 = smul.addr %s325, 2
      %s327 = smul.addr %s326, 8
      %s328 = scalar_lea.vmem %s6, %s327
      %p329 = scmp.lt.s32.totalorder %s20, 1
      %s330 = scalar_select %p329, %s20, 1
      %s331 = smul.addr %s330, 8
      %s332 = smul.addr %s331, 8
      %s333 = scalar_lea.vmem %s7, %s332
      %p334 = scmp.lt.s32.totalorder %s20, 1
      %s335 = scalar_select %p334, %s20, 1
      %s336 = smul.addr %s335, 8
      %s337 = smul.addr %s336, 8
      %s338 = scalar_lea.vmem %s8, %s337
      %v340 = vld [vmem:[%s323] sm:$0x77]
      %v341 = vld [vmem:[%s323 + $0x8] sm:$0x77]
      %344 = vst [vmem:[#allocation1] ss:$2 sm:$0xff] %v340
      %s345 = scalar_lea.vmem [#allocation1], 16
      %346 = vst [vmem:[%s345] ss:$2 sm:$0xff] %v341
      %v347 = vld.sshfl [vmem:[#allocation1] sm:$0xff pattern:$0x75316420]
      %v348 = vld.sshfl [vmem:[#allocation1 + $0x8] sm:$0xff pattern:$0x75316420]
      %v349 = vld.sshfl [vmem:[#allocation1 + $0x10] sm:$0xff pattern:$0x75316420]
      %v350 = vld.sshfl [vmem:[#allocation1 + $0x18] sm:$0xff pattern:$0x75316420]
      %v355 = vpack.c.bf16 %v347, %v347
      %v356 = vpack.c.bf16 %v348, %v348
      %v357 = vpack.c.bf16 %v349, %v349
      %v358 = vpack.c.bf16 %v350, %v350
      %v359 = vld [vmem:[%s1] sm:$0xff]
      %v360 = vld [vmem:[%s1 + $0x8] sm:$0xff]
      %v361 = vld [vmem:[%s1 + $0x10] sm:$0xff]
      %v362 = vld [vmem:[%s1 + $0x18] sm:$0xff]
      %v363 = vpack.c.bf16 %v360, %v359
      %v364 = vpack.c.bf16 %v362, %v361
      %v365 = vld [vmem:[%s2] sm:$0xff]
      %v366 = vld [vmem:[%s2 + $0x8] sm:$0xff]
      %v367 = vld [vmem:[%s2 + $0x10] sm:$0xff]
      %v368 = vld [vmem:[%s2 + $0x18] sm:$0xff]
      %370 = vset.pattern.permute.xlu0 0
      %371 = vperm.xlu0 %370, %v365
      %v372 = vpop.permute.xlu0 %371
      %375 = vset.pattern.permute.xlu0 0
      %376 = vperm.xlu0 %375, %v366
      %v377 = vpop.permute.xlu0 %376
      %380 = vset.pattern.permute.xlu0 0
      %381 = vperm.xlu0 %380, %v367
      %v382 = vpop.permute.xlu0 %381
      %385 = vset.pattern.permute.xlu0 0
      %386 = vperm.xlu0 %385, %v368
      %v387 = vpop.permute.xlu0 %386
      %vm389 = vcmask 23552
      %v391 = vsel %vm389, %v363, 0
      %v394 = vsel %vm389, %v364, 0
      %vm396 = vcmask 1040384
      %vm397 = vcmask 1041408
      %v398 = vsel %vm396, 4294967295, 65535
      %v399 = vsel %vm397, %v398, 0
      %v401 = vand.u32 %v355, %v399
      %v404 = vand.u32 %v356, %v399
      %v407 = vand.u32 %v357, %v399
      %v410 = vand.u32 %v358, %v399
      %412 = vmatpush.bf16.msra.mxu0 0
      %413 = vmatpush.bf16.msra.mxu0 0
      %414 = vmatpush.bf16.msra.mxu0 0
      %415 = vmatpush.bf16.msra.mxu0 0
      %416 = vmatpush.bf16.msra.mxu0 0
      %417 = vmatpush.bf16.msra.mxu0 0
      %418 = vmatpush.bf16.msra.mxu0 0
      %419 = vmatpush.bf16.msra.mxu0 %v401
      %420 = vmatmul.bf16.gmra.mxu0 %v391
      %v421 = vpop.f32.mrf.mxu0
      %v422 = vadd.f32 %v372, %v421
      %v423 = vpop.f32.mrf.mxu0
      %v424 = vadd.f32 %v377, %v423
      %425 = vmatmul.bf16.gmra.mxu0 %v394
      %v426 = vpop.f32.mrf.mxu0
      %v427 = vadd.f32 %v382, %v426
      %v428 = vpop.f32.mrf.mxu0
      %v429 = vadd.f32 %v387, %v428
      %430 = vdwg.mxu0
      %431 = vmatpush.bf16.msra.mxu0 0
      %432 = vmatpush.bf16.msra.mxu0 0
      %433 = vmatpush.bf16.msra.mxu0 0
      %434 = vmatpush.bf16.msra.mxu0 0
      %435 = vmatpush.bf16.msra.mxu0 0
      %436 = vmatpush.bf16.msra.mxu0 0
      %437 = vmatpush.bf16.msra.mxu0 0
      %438 = vmatpush.bf16.msra.mxu0 %v404
      %439 = vmatmul.bf16.gmra.mxu0 %v391
      %v440 = vpop.f32.mrf.mxu0
      %v441 = vadd.f32 %v372, %v440
      %v442 = vpop.f32.mrf.mxu0
      %v443 = vadd.f32 %v377, %v442
      %444 = vmatmul.bf16.gmra.mxu0 %v394
      %v445 = vpop.f32.mrf.mxu0
      %v446 = vadd.f32 %v382, %v445
      %v447 = vpop.f32.mrf.mxu0
      %v448 = vadd.f32 %v387, %v447
      %449 = vdwg.mxu0
      %450 = vmatpush.bf16.msra.mxu0 0
      %451 = vmatpush.bf16.msra.mxu0 0
      %452 = vmatpush.bf16.msra.mxu0 0
      %453 = vmatpush.bf16.msra.mxu0 0
      %454 = vmatpush.bf16.msra.mxu0 0
      %455 = vmatpush.bf16.msra.mxu0 0
      %456 = vmatpush.bf16.msra.mxu0 0
      %457 = vmatpush.bf16.msra.mxu0 %v407
      %458 = vmatmul.bf16.gmra.mxu0 %v391
      %v459 = vpop.f32.mrf.mxu0
      %v460 = vadd.f32 %v372, %v459
      %v461 = vpop.f32.mrf.mxu0
      %v462 = vadd.f32 %v377, %v461
      %463 = vmatmul.bf16.gmra.mxu0 %v394
      %v464 = vpop.f32.mrf.mxu0
      %v465 = vadd.f32 %v382, %v464
      %v466 = vpop.f32.mrf.mxu0
      %v467 = vadd.f32 %v387, %v466
      %468 = vdwg.mxu0
      %469 = vmatpush.bf16.msra.mxu0 0
      %470 = vmatpush.bf16.msra.mxu0 0
      %471 = vmatpush.bf16.msra.mxu0 0
      %472 = vmatpush.bf16.msra.mxu0 0
      %473 = vmatpush.bf16.msra.mxu0 0
      %474 = vmatpush.bf16.msra.mxu0 0
      %475 = vmatpush.bf16.msra.mxu0 0
      %476 = vmatpush.bf16.msra.mxu0 %v410
      %477 = vmatmul.bf16.gmra.mxu0 %v391
      %v478 = vpop.f32.mrf.mxu0
      %v479 = vadd.f32 %v372, %v478
      %v480 = vpop.f32.mrf.mxu0
      %v481 = vadd.f32 %v377, %v480
      %482 = vmatmul.bf16.gmra.mxu0 %v394
      %v483 = vpop.f32.mrf.mxu0
      %v484 = vadd.f32 %v382, %v483
      %v485 = vpop.f32.mrf.mxu0
      %v486 = vadd.f32 %v387, %v485
      %487 = vdwg.mxu0
      %v488 = vmax.f32 %v422, 0.0
      %v489 = vmax.f32 %v441, 0.0
      %v490 = vmax.f32 %v460, 0.0
      %v491 = vmax.f32 %v479, 0.0
      %v492 = vmax.f32 %v424, 0.0
      %v493 = vmax.f32 %v443, 0.0
      %v494 = vmax.f32 %v462, 0.0
      %v495 = vmax.f32 %v481, 0.0
      %v496 = vmax.f32 %v427, 0.0
      %v497 = vmax.f32 %v446, 0.0
      %v498 = vmax.f32 %v465, 0.0
      %v499 = vmax.f32 %v484, 0.0
      %v500 = vmax.f32 %v429, 0.0
      %v501 = vmax.f32 %v448, 0.0
      %v502 = vmax.f32 %v467, 0.0
      %v503 = vmax.f32 %v486, 0.0
      %v504 = vpack.c.bf16 %v492, %v488
      %v505 = vpack.c.bf16 %v493, %v489
      %v506 = vpack.c.bf16 %v494, %v490
      %v507 = vpack.c.bf16 %v495, %v491
      %v508 = vpack.c.bf16 %v500, %v496
      %v509 = vpack.c.bf16 %v501, %v497
      %v510 = vpack.c.bf16 %v502, %v498
      %v511 = vpack.c.bf16 %v503, %v499
      %v512 = vld [vmem:[%s3] sm:$0xff]
      %v513 = vld [vmem:[%s3 + $0x8] sm:$0xff]
      %v514 = vpack.c.bf16 %v513, %v512
      %v515 = vld [vmem:[%s4] sm:$0xff]
      %v516 = vld [vmem:[%s4 + $0x8] sm:$0xff]
      %518 = vset.pattern.permute.xlu0 0
      %519 = vperm.xlu0 %518, %v515
      %v520 = vpop.permute.xlu0 %519
      %523 = vset.pattern.permute.xlu0 0
      %524 = vperm.xlu0 %523, %v516
      %v525 = vpop.permute.xlu0 %524
      %vm527 = vcmask 261120
      %v529 = vsel %vm527, %v514, 0
      %531 = vmatpush.bf16.msra.mxu0 0
      %532 = vmatpush.bf16.msra.mxu0 0
      %533 = vmatpush.bf16.msra.mxu0 0
      %534 = vmatpush.bf16.msra.mxu0 0
      %535 = vmatpush.bf16.msra.mxu0 0
      %536 = vmatpush.bf16.msra.mxu0 0
      %537 = vmatpush.bf16.msra.mxu0 %v508
      %538 = vmatpush.bf16.msra.mxu0 %v504
      %539 = vmatmul.bf16.gmra.mxu0 %v529
      %v540 = vpop.f32.mrf.mxu0
      %v541 = vadd.f32 %v520, %v540
      %v542 = vpop.f32.mrf.mxu0
      %v543 = vadd.f32 %v525, %v542
      %544 = vdwg.mxu0
      %545 = vmatpush.bf16.msra.mxu0 0
      %546 = vmatpush.bf16.msra.mxu0 0
      %547 = vmatpush.bf16.msra.mxu0 0
      %548 = vmatpush.bf16.msra.mxu0 0
      %549 = vmatpush.bf16.msra.mxu0 0
      %550 = vmatpush.bf16.msra.mxu0 0
      %551 = vmatpush.bf16.msra.mxu0 %v509
      %552 = vmatpush.bf16.msra.mxu0 %v505
      %553 = vmatmul.bf16.gmra.mxu0 %v529
      %v554 = vpop.f32.mrf.mxu0
      %v555 = vadd.f32 %v520, %v554
      %v556 = vpop.f32.mrf.mxu0
      %v557 = vadd.f32 %v525, %v556
      %558 = vdwg.mxu0
      %559 = vmatpush.bf16.msra.mxu0 0
      %560 = vmatpush.bf16.msra.mxu0 0
      %561 = vmatpush.bf16.msra.mxu0 0
      %562 = vmatpush.bf16.msra.mxu0 0
      %563 = vmatpush.bf16.msra.mxu0 0
      %564 = vmatpush.bf16.msra.mxu0 0
      %565 = vmatpush.bf16.msra.mxu0 %v510
      %566 = vmatpush.bf16.msra.mxu0 %v506
      %567 = vmatmul.bf16.gmra.mxu0 %v529
      %v568 = vpop.f32.mrf.mxu0
      %v569 = vadd.f32 %v520, %v568
      %v570 = vpop.f32.mrf.mxu0
      %v571 = vadd.f32 %v525, %v570
      %572 = vdwg.mxu0
      %573 = vmatpush.bf16.msra.mxu0 0
      %574 = vmatpush.bf16.msra.mxu0 0
      %575 = vmatpush.bf16.msra.mxu0 0
      %576 = vmatpush.bf16.msra.mxu0 0
      %577 = vmatpush.bf16.msra.mxu0 0
      %578 = vmatpush.bf16.msra.mxu0 0
      %579 = vmatpush.bf16.msra.mxu0 %v511
      %580 = vmatpush.bf16.msra.mxu0 %v507
      %581 = vmatmul.bf16.gmra.mxu0 %v529
      %v582 = vpop.f32.mrf.mxu0
      %v583 = vadd.f32 %v520, %v582
      %v584 = vpop.f32.mrf.mxu0
      %v585 = vadd.f32 %v525, %v584
      %586 = vdwg.mxu0
      %587 = vst [vmem:[%s333] sm:$0xff] %v541
      %588 = vst [vmem:[%s333 + $0x8] sm:$0xff] %v555
      %589 = vst [vmem:[%s333 + $0x10] sm:$0xff] %v569
      %590 = vst [vmem:[%s333 + $0x18] sm:$0xff] %v583
      %591 = vst [vmem:[%s333 + $0x20] sm:$0xff] %v543
      %592 = vst [vmem:[%s333 + $0x28] sm:$0xff] %v557
      %593 = vst [vmem:[%s333 + $0x30] sm:$0xff] %v571
      %594 = vst [vmem:[%s333 + $0x38] sm:$0xff] %v585
      %v595 = vld [vmem:[%s5] sm:$0xf]
      %v596 = vld [vmem:[%s5 + $0x4] sm:$0xf]
      %v597 = vld [vmem:[%s5 + $0x8] sm:$0xf]
      %v598 = vld [vmem:[%s5 + $0xc] sm:$0xf]
      %v599 = vld [vmem:[%s5 + $0x10] sm:$0xf]
      %v600 = vld [vmem:[%s5 + $0x14] sm:$0xf]
      %v601 = vld [vmem:[%s5 + $0x18] sm:$0xf]
      %v602 = vld [vmem:[%s5 + $0x1c] sm:$0xf]
      %v603 = vld [vmem:[%s5 + $0x20] sm:$0xf]
      %v604 = vld [vmem:[%s5 + $0x24] sm:$0xf]
      %v605 = vld [vmem:[%s5 + $0x28] sm:$0xf]
      %v606 = vld [vmem:[%s5 + $0x2c] sm:$0xf]
      %v607 = vld [vmem:[%s5 + $0x30] sm:$0xf]
      %v608 = vld [vmem:[%s5 + $0x34] sm:$0xf]
      %v609 = vld [vmem:[%s5 + $0x38] sm:$0xf]
      %v610 = vld [vmem:[%s5 + $0x3c] sm:$0xf]
      %v611 = vld [vmem:[%s5 + $0x40] sm:$0xf]
      %v612 = vld [vmem:[%s5 + $0x44] sm:$0xf]
      %v613 = vld [vmem:[%s5 + $0x48] sm:$0xf]
      %v614 = vld [vmem:[%s5 + $0x4c] sm:$0xf]
      %v615 = vld [vmem:[%s5 + $0x50] sm:$0xf]
      %v616 = vld [vmem:[%s5 + $0x54] sm:$0xf]
      %v617 = vld [vmem:[%s5 + $0x58] sm:$0xf]
      %v618 = vld [vmem:[%s5 + $0x5c] sm:$0xf]
      %v619 = vld [vmem:[%s5 + $0x60] sm:$0xf]
      %v620 = vld [vmem:[%s5 + $0x64] sm:$0xf]
      %v621 = vld [vmem:[%s5 + $0x68] sm:$0xf]
      %v622 = vld [vmem:[%s5 + $0x6c] sm:$0xf]
      %v623 = vld [vmem:[%s5 + $0x70] sm:$0xf]
      %v624 = vld [vmem:[%s5 + $0x74] sm:$0xf]
      %v625 = vld [vmem:[%s5 + $0x78] sm:$0xf]
      %v626 = vld [vmem:[%s5 + $0x7c] sm:$0xf]
      %v627 = vld [vmem:[%s5 + $0x80] sm:$0xf]
      %v628 = vld [vmem:[%s5 + $0x84] sm:$0xf]
      %v629 = vld [vmem:[%s5 + $0x88] sm:$0xf]
      %v630 = vld [vmem:[%s5 + $0x8c] sm:$0xf]
      %v631 = vld [vmem:[%s5 + $0x90] sm:$0xf]
      %v632 = vld [vmem:[%s5 + $0x94] sm:$0xf]
      %v633 = vld [vmem:[%s5 + $0x98] sm:$0xf]
      %v634 = vld [vmem:[%s5 + $0x9c] sm:$0xf]
      %v635 = vld [vmem:[%s5 + $0xa0] sm:$0xf]
      %v636 = vld [vmem:[%s5 + $0xa4] sm:$0xf]
      %v637 = vld [vmem:[%s5 + $0xa8] sm:$0xf]
      %v638 = vld [vmem:[%s5 + $0xac] sm:$0xf]
      %v639 = vld [vmem:[%s5 + $0xb0] sm:$0xf]
      %v640 = vld [vmem:[%s5 + $0xb4] sm:$0xf]
      %v641 = vld [vmem:[%s5 + $0xb8] sm:$0xf]
      %v642 = vld [vmem:[%s5 + $0xbc] sm:$0xf]
      %v643 = vld [vmem:[%s5 + $0xc0] sm:$0xf]
      %v644 = vld [vmem:[%s5 + $0xc4] sm:$0xf]
      %v645 = vld [vmem:[%s5 + $0xc8] sm:$0xf]
      %v646 = vld [vmem:[%s5 + $0xcc] sm:$0xf]
      %v647 = vld [vmem:[%s5 + $0xd0] sm:$0xf]
      %v648 = vld [vmem:[%s5 + $0xd4] sm:$0xf]
      %v649 = vld [vmem:[%s5 + $0xd8] sm:$0xf]
      %v650 = vld [vmem:[%s5 + $0xdc] sm:$0xf]
      %v651 = vld [vmem:[%s5 + $0xe0] sm:$0xf]
      %v652 = vld [vmem:[%s5 + $0xe4] sm:$0xf]
      %v653 = vld [vmem:[%s5 + $0xe8] sm:$0xf]
      %v654 = vld [vmem:[%s5 + $0xec] sm:$0xf]
      %v655 = vld [vmem:[%s5 + $0xf0] sm:$0xf]
      %v656 = vld [vmem:[%s5 + $0xf4] sm:$0xf]
      %v657 = vld [vmem:[%s5 + $0xf8] sm:$0xf]
      %v658 = vld [vmem:[%s5 + $0xfc] sm:$0xf]
      %v723 = vunpack.c.l.b16 %v595
      %v724 = vunpack.c.l.b16 %v596
      %v725 = vunpack.c.l.b16 %v597
      %v726 = vunpack.c.l.b16 %v598
      %v727 = vunpack.c.l.b16 %v599
      %v728 = vunpack.c.l.b16 %v600
      %v729 = vunpack.c.l.b16 %v601
      %v730 = vunpack.c.l.b16 %v602
      %v731 = vunpack.c.l.b16 %v603
      %v732 = vunpack.c.l.b16 %v604
      %v733 = vunpack.c.l.b16 %v605
      %v734 = vunpack.c.l.b16 %v606
      %v735 = vunpack.c.l.b16 %v607
      %v736 = vunpack.c.l.b16 %v608
      %v737 = vunpack.c.l.b16 %v609
      %v738 = vunpack.c.l.b16 %v610
      %v739 = vunpack.c.l.b16 %v611
      %v740 = vunpack.c.l.b16 %v612
      %v741 = vunpack.c.l.b16 %v613
      %v742 = vunpack.c.l.b16 %v614
      %v743 = vunpack.c.l.b16 %v615
      %v744 = vunpack.c.l.b16 %v616
      %v745 = vunpack.c.l.b16 %v617
      %v746 = vunpack.c.l.b16 %v618
      %v747 = vunpack.c.l.b16 %v619
      %v748 = vunpack.c.l.b16 %v620
      %v749 = vunpack.c.l.b16 %v621
      %v750 = vunpack.c.l.b16 %v622
      %v751 = vunpack.c.l.b16 %v623
      %v752 = vunpack.c.l.b16 %v624
      %v753 = vunpack.c.l.b16 %v625
      %v754 = vunpack.c.l.b16 %v626
      %v755 = vunpack.c.l.b16 %v627
      %v756 = vunpack.c.l.b16 %v628
      %v757 = vunpack.c.l.b16 %v629
      %v758 = vunpack.c.l.b16 %v630
      %v759 = vunpack.c.l.b16 %v631
      %v760 = vunpack.c.l.b16 %v632
      %v761 = vunpack.c.l.b16 %v633
      %v762 = vunpack.c.l.b16 %v634
      %v763 = vunpack.c.l.b16 %v635
      %v764 = vunpack.c.l.b16 %v636
      %v765 = vunpack.c.l.b16 %v637
      %v766 = vunpack.c.l.b16 %v638
      %v767 = vunpack.c.l.b16 %v639
      %v768 = vunpack.c.l.b16 %v640
      %v769 = vunpack.c.l.b16 %v641
      %v770 = vunpack.c.l.b16 %v642
      %v771 = vunpack.c.l.b16 %v643
      %v772 = vunpack.c.l.b16 %v644
      %v773 = vunpack.c.l.b16 %v645
      %v774 = vunpack.c.l.b16 %v646
      %v775 = vunpack.c.l.b16 %v647
      %v776 = vunpack.c.l.b16 %v648
      %v777 = vunpack.c.l.b16 %v649
      %v778 = vunpack.c.l.b16 %v650
      %v779 = vunpack.c.l.b16 %v651
      %v780 = vunpack.c.l.b16 %v652
      %v781 = vunpack.c.l.b16 %v653
      %v782 = vunpack.c.l.b16 %v654
      %v783 = vunpack.c.l.b16 %v655
      %v784 = vunpack.c.l.b16 %v656
      %v785 = vunpack.c.l.b16 %v657
      %v786 = vunpack.c.l.b16 %v658
      %v787 = vpack.c.b16 %v724, %v723
      %v788 = vpack.c.b16 %v726, %v725
      %v789 = vpack.c.b16 %v728, %v727
      %v790 = vpack.c.b16 %v730, %v729
      %v791 = vpack.c.b16 %v732, %v731
      %v792 = vpack.c.b16 %v734, %v733
      %v793 = vpack.c.b16 %v736, %v735
      %v794 = vpack.c.b16 %v738, %v737
      %v795 = vpack.c.b16 %v740, %v739
      %v796 = vpack.c.b16 %v742, %v741
      %v797 = vpack.c.b16 %v744, %v743
      %v798 = vpack.c.b16 %v746, %v745
      %v799 = vpack.c.b16 %v748, %v747
      %v800 = vpack.c.b16 %v750, %v749
      %v801 = vpack.c.b16 %v752, %v751
      %v802 = vpack.c.b16 %v754, %v753
      %v803 = vpack.c.b16 %v756, %v755
      %v804 = vpack.c.b16 %v758, %v757
      %v805 = vpack.c.b16 %v760, %v759
      %v806 = vpack.c.b16 %v762, %v761
      %v807 = vpack.c.b16 %v764, %v763
      %v808 = vpack.c.b16 %v766, %v765
      %v809 = vpack.c.b16 %v768, %v767
      %v810 = vpack.c.b16 %v770, %v769
      %v811 = vpack.c.b16 %v772, %v771
      %v812 = vpack.c.b16 %v774, %v773
      %v813 = vpack.c.b16 %v776, %v775
      %v814 = vpack.c.b16 %v778, %v777
      %v815 = vpack.c.b16 %v780, %v779
      %v816 = vpack.c.b16 %v782, %v781
      %v817 = vpack.c.b16 %v784, %v783
      %v818 = vpack.c.b16 %v786, %v785
      %851 = vmatpush.bf16.msra.mxu0 %v794
      %852 = vmatpush.bf16.msra.mxu0 %v793
      %853 = vmatpush.bf16.msra.mxu0 %v792
      %854 = vmatpush.bf16.msra.mxu0 %v791
      %855 = vmatpush.bf16.msra.mxu0 %v790
      %856 = vmatpush.bf16.msra.mxu0 %v789
      %857 = vmatpush.bf16.msra.mxu0 %v788
      %858 = vmatpush.bf16.msra.mxu0 %v787
      %859 = vmatmul.bf16.gmra.mxu0 %v504
      %v860 = vpop.f32.mrf.mxu0
      %v861 = vadd.f32 0.0, %v860
      %v862 = vpop.f32.mrf.mxu0
      %v863 = vadd.f32 0.0, %v862
      %864 = vmatmul.bf16.gmra.mxu0 %v508
      %v865 = vpop.f32.mrf.mxu0
      %v866 = vadd.f32 0.0, %v865
      %v867 = vpop.f32.mrf.mxu0
      %v868 = vadd.f32 0.0, %v867
      %869 = vdwg.mxu0
      %870 = vmatpush.bf16.msra.mxu0 %v802
      %871 = vmatpush.bf16.msra.mxu0 %v801
      %872 = vmatpush.bf16.msra.mxu0 %v800
      %873 = vmatpush.bf16.msra.mxu0 %v799
      %874 = vmatpush.bf16.msra.mxu0 %v798
      %875 = vmatpush.bf16.msra.mxu0 %v797
      %876 = vmatpush.bf16.msra.mxu0 %v796
      %877 = vmatpush.bf16.msra.mxu0 %v795
      %878 = vmatmul.bf16.gmra.mxu0 %v505
      %v879 = vpop.f32.mrf.mxu0
      %v880 = vadd.f32 %v861, %v879
      %v881 = vpop.f32.mrf.mxu0
      %v882 = vadd.f32 %v863, %v881
      %883 = vmatmul.bf16.gmra.mxu0 %v509
      %v884 = vpop.f32.mrf.mxu0
      %v885 = vadd.f32 %v866, %v884
      %v886 = vpop.f32.mrf.mxu0
      %v887 = vadd.f32 %v868, %v886
      %888 = vdwg.mxu0
      %889 = vmatpush.bf16.msra.mxu0 %v810
      %890 = vmatpush.bf16.msra.mxu0 %v809
      %891 = vmatpush.bf16.msra.mxu0 %v808
      %892 = vmatpush.bf16.msra.mxu0 %v807
      %893 = vmatpush.bf16.msra.mxu0 %v806
      %894 = vmatpush.bf16.msra.mxu0 %v805
      %895 = vmatpush.bf16.msra.mxu0 %v804
      %896 = vmatpush.bf16.msra.mxu0 %v803
      %897 = vmatmul.bf16.gmra.mxu0 %v506
      %v898 = vpop.f32.mrf.mxu0
      %v899 = vadd.f32 %v880, %v898
      %v900 = vpop.f32.mrf.mxu0
      %v901 = vadd.f32 %v882, %v900
      %902 = vmatmul.bf16.gmra.mxu0 %v510
      %v903 = vpop.f32.mrf.mxu0
      %v904 = vadd.f32 %v885, %v903
      %v905 = vpop.f32.mrf.mxu0
      %v906 = vadd.f32 %v887, %v905
      %907 = vdwg.mxu0
      %908 = vmatpush.bf16.msra.mxu0 %v818
      %909 = vmatpush.bf16.msra.mxu0 %v817
      %910 = vmatpush.bf16.msra.mxu0 %v816
      %911 = vmatpush.bf16.msra.mxu0 %v815
      %912 = vmatpush.bf16.msra.mxu0 %v814
      %913 = vmatpush.bf16.msra.mxu0 %v813
      %914 = vmatpush.bf16.msra.mxu0 %v812
      %915 = vmatpush.bf16.msra.mxu0 %v811
      %916 = vmatmul.bf16.gmra.mxu0 %v507
      %v917 = vpop.f32.mrf.mxu0
      %v918 = vadd.f32 %v899, %v917
      %v919 = vpop.f32.mrf.mxu0
      %v920 = vadd.f32 %v901, %v919
      %921 = vmatmul.bf16.gmra.mxu0 %v511
      %v922 = vpop.f32.mrf.mxu0
      %v923 = vadd.f32 %v904, %v922
      %v924 = vpop.f32.mrf.mxu0
      %v925 = vadd.f32 %v906, %v924
      %926 = vdwg.mxu0
      %v927 = vmul.f32 %v918, 0.027777778
      %v928 = vmul.f32 %v920, 0.027777778
      %v929 = vmul.f32 %v923, 0.027777778
      %v930 = vmul.f32 %v925, 0.027777778
      %v931 = vld [vmem:[%s328] sm:$0xff]
      %v932 = vld [vmem:[%s328 + $0x8] sm:$0x3]
      %vm933 = vcmask 80896
      %v934 = vsel %vm933, %v931, 0.0
      %vm935 = vcmask 74752
      %v936 = vsel %vm935, %v932, 0.0
      %v937 = vadd.f32 %v934, %v936
      %v938 = vrot.slane %v937, 4
      %v939 = vadd.f32 %v937, %v938
      %v940 = vrot.slane %v939, 2
      %v941 = vadd.f32 %v939, %v940
      %v942 = vrot.slane %v941, 1
      %v943 = vadd.f32 %v941, %v942
      %v944 = vmax.f32 %v943, 1e-06
      %v946 = vsel %vm933, %v927, 0
      %v949 = vsel %vm933, %v928, 0
      %v952 = vsel %vm933, %v929, 0
      %v955 = vsel %vm933, %v930, 0
      %v958 = vsel %vm397, %v932, 0
      %960 = vmatpush.msra.mxu0 0.0
      %961 = vmatpush.msra.mxu0 0.0
      %962 = vmatpush.msra.mxu0 0.0
      %963 = vmatpush.msra.mxu0 0.0
      %964 = vmatpush.msra.mxu0 0.0
      %965 = vmatpush.msra.mxu0 0.0
      %966 = vmatpush.msra.mxu0 0.0
      %967 = vmatpush.msra.mxu0 0.0
      %968 = vmatpush.msra.mxu0 0.0
      %969 = vmatpush.msra.mxu0 0.0
      %970 = vmatpush.msra.mxu0 0.0
      %971 = vmatpush.msra.mxu0 0.0
      %972 = vmatpush.msra.mxu0 0.0
      %973 = vmatpush.msra.mxu0 0.0
      %974 = vmatpush.msra.mxu0 %v958
      %975 = vmatpush.msra.mxu0 %v931
      %976 = vmatmul.f32.gmra.mxu0 %v946
      %v977 = vpop.f32.mrf.mxu0
      %v978 = vadd.f32 0.0, %v977
      %979 = vmatmul.f32.gmra.mxu0 %v949
      %v980 = vpop.f32.mrf.mxu0
      %v981 = vadd.f32 0.0, %v980
      %982 = vmatmul.f32.gmra.mxu0 %v952
      %v983 = vpop.f32.mrf.mxu0
      %v984 = vadd.f32 0.0, %v983
      %985 = vmatmul.f32.gmra.mxu0 %v955
      %v986 = vpop.f32.mrf.mxu0
      %v987 = vadd.f32 0.0, %v986
      %988 = vdwg.mxu0
      %v989 = vrcp.pop %v944
      %v990 = vmul.f32 %v944, %v989
      %v991 = vsub.f32 1.0, %v990
      %v992 = vmul.f32 %v989, %v991
      %v993 = vadd.f32 %v989, %v992
      %vm994 = vweird.f32 %v944
      %vm995 = vweird.f32 %v989
      %vm996 = vmor %vm994, %vm995
      %v997 = vsel %vm996, %v989, %v993
      %v998 = vand.u32 2147483647, %v944
      %vm999 = vcmp.eq.f32.partialorder %v998, 8.507059e+37
      %v1000 = vand.u32 %v944, 2147483648
      %v1001 = vor.u32 1.1754944e-38, %v1000
      %v1002 = vsel %vm999, %v1001, %v997
      %v1003 = vmul.f32 %v978, %v1002
      %v1004 = vmul.f32 %v981, %v1002
      %v1005 = vmul.f32 %v984, %v1002
      %v1006 = vmul.f32 %v987, %v1002
      %v1007 = vmul.f32 %v1003, %v1003
      %v1008 = vmul.f32 %v1004, %v1004
      %v1009 = vmul.f32 %v1005, %v1005
      %v1010 = vmul.f32 %v1006, %v1006
      %v1011 = vsel %vm933, %v1007, 0.0
      %v1012 = vsel %vm933, %v1008, 0.0
      %v1013 = vadd.f32 %v1011, %v1012
      %v1014 = vsel %vm933, %v1009, 0.0
      %v1015 = vadd.f32 %v1013, %v1014
      %v1016 = vsel %vm933, %v1010, 0.0
      %v1017 = vadd.f32 %v1015, %v1016
      %v1018 = vrot.slane %v1017, 4
      %v1019 = vadd.f32 %v1017, %v1018
      %v1020 = vrot.slane %v1019, 2
      %v1021 = vadd.f32 %v1019, %v1020
      %v1022 = vrot.slane %v1021, 1
      %v1023 = vadd.f32 %v1021, %v1022
      %v1024 = vmax.f32 %v1023, 1e-24
      %v1025 = vrsqrt.pop %v1024
      %v1026 = vmul.f32 %v1025, %v1024
      %v1027 = vmul.f32 %v1026, %v1025
      %v1028 = vmul.f32 0.5, %v1027
      %v1029 = vsub.f32 1.5, %v1028
      %v1030 = vmul.f32 %v1025, %v1029
      %vm1031 = vweird.f32 %v1024
      %vm1032 = vweird.f32 %v1025
      %vm1033 = vmor %vm1031, %vm1032
      %v1034 = vsel %vm1033, %v1025, %v1030
      %v1035 = vmul.f32 %v1003, %v1034
      %v1036 = vmul.f32 %v1004, %v1034
      %v1037 = vmul.f32 %v1005, %v1034
      %v1038 = vmul.f32 %v1006, %v1034
      %1039 = vxpose.xlu0.b32.start [1/16] %v1035, 128
      %1040 = vxpose.xlu0.b32.cont [2/16] %v1036, 128
      %1041 = vxpose.xlu0.b32.cont [3/16] %v1037, 128
      %1042 = vxpose.xlu0.b32.cont [4/16] %v1038, 128
      %1043 = vxpose.xlu0.b32.cont [5/16] 0.0, 128
      %1044 = vxpose.xlu0.b32.cont [6/16] 0.0, 128
      %1045 = vxpose.xlu0.b32.cont [7/16] 0.0, 128
      %1046 = vxpose.xlu0.b32.cont [8/16] 0.0, 128
      %1047 = vxpose.xlu0.b32.cont [9/16] 0.0, 128
      %1048 = vxpose.xlu0.b32.cont [10/16] 0.0, 128
      %1049 = vxpose.xlu0.b32.cont [11/16] 0.0, 128
      %1050 = vxpose.xlu0.b32.cont [12/16] 0.0, 128
      %1051 = vxpose.xlu0.b32.cont [13/16] 0.0, 128
      %1052 = vxpose.xlu0.b32.cont [14/16] 0.0, 128
      %1053 = vxpose.xlu0.b32.cont [15/16] 0.0, 128
      %1054 = vxpose.xlu0.b32.end [16/16] 0.0, 128
      %v1055 = vpop.trf.xlu0
      %v1056 = vpop.trf.xlu0
      %v1057 = vpop.trf.xlu0
      %v1058 = vpop.trf.xlu0
      %v1059 = vpop.trf.xlu0
      %v1060 = vpop.trf.xlu0
      %v1061 = vpop.trf.xlu0
      %v1062 = vpop.trf.xlu0
      %v1063 = vpop.trf.xlu0
      %v1064 = vpop.trf.xlu0
      %v1065 = vpop.trf.xlu0
      %v1066 = vpop.trf.xlu0
      %v1067 = vpop.trf.xlu0
      %v1068 = vpop.trf.xlu0
      %v1069 = vpop.trf.xlu0
      %v1070 = vpop.trf.xlu0
      %v1071 = vsel %vm397, %v1056, 0.0
      %v1072 = vmul.f32 %v488, %v488
      %v1073 = vmul.f32 %v489, %v489
      %v1074 = vmul.f32 %v490, %v490
      %v1075 = vmul.f32 %v491, %v491
      %v1076 = vmul.f32 %v492, %v492
      %v1077 = vmul.f32 %v493, %v493
      %v1078 = vmul.f32 %v494, %v494
      %v1079 = vmul.f32 %v495, %v495
      %v1080 = vmul.f32 %v496, %v496
      %v1081 = vmul.f32 %v497, %v497
      %v1082 = vmul.f32 %v498, %v498
      %v1083 = vmul.f32 %v499, %v499
      %v1084 = vmul.f32 %v500, %v500
      %v1085 = vmul.f32 %v501, %v501
      %v1086 = vmul.f32 %v502, %v502
      %v1087 = vmul.f32 %v503, %v503
      %v1088 = vadd.f32 %v1072, %v1076
      %v1089 = vadd.f32 %v1088, %v1080
      %v1090 = vadd.f32 %v1089, %v1084
      %v1091 = vrot.slane %v1090, 4
      %v1092 = vadd.f32 %v1090, %v1091
      %v1093 = vrot.slane %v1092, 2
      %v1094 = vadd.f32 %v1092, %v1093
      %v1095 = vrot.slane %v1094, 1
      %v1096 = vadd.f32 %v1094, %v1095
      %v1097 = vadd.f32 %v1073, %v1077
      %v1098 = vadd.f32 %v1097, %v1081
      %v1099 = vadd.f32 %v1098, %v1085
      %v1100 = vrot.slane %v1099, 4
      %v1101 = vadd.f32 %v1099, %v1100
      %v1102 = vrot.slane %v1101, 2
      %v1103 = vadd.f32 %v1101, %v1102
      %v1104 = vrot.slane %v1103, 1
      %v1105 = vadd.f32 %v1103, %v1104
      %v1106 = vadd.f32 %v1074, %v1078
      %v1107 = vadd.f32 %v1106, %v1082
      %v1108 = vadd.f32 %v1107, %v1086
      %v1109 = vrot.slane %v1108, 4
      %v1110 = vadd.f32 %v1108, %v1109
      %v1111 = vrot.slane %v1110, 2
      %v1112 = vadd.f32 %v1110, %v1111
      %v1113 = vrot.slane %v1112, 1
      %v1114 = vadd.f32 %v1112, %v1113
      %v1115 = vadd.f32 %v1075, %v1079
      %v1116 = vadd.f32 %v1115, %v1083
      %v1117 = vadd.f32 %v1116, %v1087
      %v1118 = vrot.slane %v1117, 4
      %v1119 = vadd.f32 %v1117, %v1118
      %v1120 = vrot.slane %v1119, 2
      %v1121 = vadd.f32 %v1119, %v1120
      %v1122 = vrot.slane %v1121, 1
      %v1123 = vadd.f32 %v1121, %v1122
      %v1124 = vmax.f32 %v1096, 1e-24
      %v1125 = vmax.f32 %v1105, 1e-24
      %v1126 = vmax.f32 %v1114, 1e-24
      %v1127 = vmax.f32 %v1123, 1e-24
      %v1128 = vrsqrt.pop %v1124
      %v1129 = vmul.f32 %v1128, %v1124
      %v1130 = vmul.f32 %v1129, %v1128
      %v1131 = vmul.f32 0.5, %v1130
      %v1132 = vsub.f32 1.5, %v1131
      %v1133 = vmul.f32 %v1128, %v1132
      %vm1134 = vweird.f32 %v1124
      %vm1135 = vweird.f32 %v1128
      %vm1136 = vmor %vm1134, %vm1135
      %v1137 = vsel %vm1136, %v1128, %v1133
      %v1138 = vrsqrt.pop %v1125
      %v1139 = vmul.f32 %v1138, %v1125
      %v1140 = vmul.f32 %v1139, %v1138
      %v1141 = vmul.f32 0.5, %v1140
      %v1142 = vsub.f32 1.5, %v1141
      %v1143 = vmul.f32 %v1138, %v1142
      %vm1144 = vweird.f32 %v1125
      %vm1145 = vweird.f32 %v1138
      %vm1146 = vmor %vm1144, %vm1145
      %v1147 = vsel %vm1146, %v1138, %v1143
      %v1148 = vrsqrt.pop %v1126
      %v1149 = vmul.f32 %v1148, %v1126
      %v1150 = vmul.f32 %v1149, %v1148
      %v1151 = vmul.f32 0.5, %v1150
      %v1152 = vsub.f32 1.5, %v1151
      %v1153 = vmul.f32 %v1148, %v1152
      %vm1154 = vweird.f32 %v1126
      %vm1155 = vweird.f32 %v1148
      %vm1156 = vmor %vm1154, %vm1155
      %v1157 = vsel %vm1156, %v1148, %v1153
      %v1158 = vrsqrt.pop %v1127
      %v1159 = vmul.f32 %v1158, %v1127
      %v1160 = vmul.f32 %v1159, %v1158
      %v1161 = vmul.f32 0.5, %v1160
      %v1162 = vsub.f32 1.5, %v1161
      %v1163 = vmul.f32 %v1158, %v1162
      %vm1164 = vweird.f32 %v1127
      %vm1165 = vweird.f32 %v1158
      %vm1166 = vmor %vm1164, %vm1165
      %v1167 = vsel %vm1166, %v1158, %v1163
      %v1168 = vpack.c.bf16 %v1071, %v1055
      %v1170 = vsel %vm527, %v1168, 0
      %1172 = vmatpush.bf16.msra.mxu0 0
      %1173 = vmatpush.bf16.msra.mxu0 0
      %1174 = vmatpush.bf16.msra.mxu0 0
      %1175 = vmatpush.bf16.msra.mxu0 0
      %1176 = vmatpush.bf16.msra.mxu0 0
      %1177 = vmatpush.bf16.msra.mxu0 0
      %1178 = vmatpush.bf16.msra.mxu0 %v508
      %1179 = vmatpush.bf16.msra.mxu0 %v504
      %1180 = vmatmul.bf16.gmra.mxu0 %v1170
      %v1181 = vpop.f32.mrf.mxu0
      %v1182 = vadd.f32 0.0, %v1181
      %v1183 = vpop.f32.mrf.mxu0
      %v1184 = vadd.f32 0.0, %v1183
      %1185 = vdwg.mxu0
      %1186 = vmatpush.bf16.msra.mxu0 0
      %1187 = vmatpush.bf16.msra.mxu0 0
      %1188 = vmatpush.bf16.msra.mxu0 0
      %1189 = vmatpush.bf16.msra.mxu0 0
      %1190 = vmatpush.bf16.msra.mxu0 0
      %1191 = vmatpush.bf16.msra.mxu0 0
      %1192 = vmatpush.bf16.msra.mxu0 %v509
      %1193 = vmatpush.bf16.msra.mxu0 %v505
      %1194 = vmatmul.bf16.gmra.mxu0 %v1170
      %v1195 = vpop.f32.mrf.mxu0
      %v1196 = vadd.f32 0.0, %v1195
      %v1197 = vpop.f32.mrf.mxu0
      %v1198 = vadd.f32 0.0, %v1197
      %1199 = vdwg.mxu0
      %1200 = vmatpush.bf16.msra.mxu0 0
      %1201 = vmatpush.bf16.msra.mxu0 0
      %1202 = vmatpush.bf16.msra.mxu0 0
      %1203 = vmatpush.bf16.msra.mxu0 0
      %1204 = vmatpush.bf16.msra.mxu0 0
      %1205 = vmatpush.bf16.msra.mxu0 0
      %1206 = vmatpush.bf16.msra.mxu0 %v510
      %1207 = vmatpush.bf16.msra.mxu0 %v506
      %1208 = vmatmul.bf16.gmra.mxu0 %v1170
      %v1209 = vpop.f32.mrf.mxu0
      %v1210 = vadd.f32 0.0, %v1209
      %v1211 = vpop.f32.mrf.mxu0
      %v1212 = vadd.f32 0.0, %v1211
      %1213 = vdwg.mxu0
      %1214 = vmatpush.bf16.msra.mxu0 0
      %1215 = vmatpush.bf16.msra.mxu0 0
      %1216 = vmatpush.bf16.msra.mxu0 0
      %1217 = vmatpush.bf16.msra.mxu0 0
      %1218 = vmatpush.bf16.msra.mxu0 0
      %1219 = vmatpush.bf16.msra.mxu0 0
      %1220 = vmatpush.bf16.msra.mxu0 %v511
      %1221 = vmatpush.bf16.msra.mxu0 %v507
      %1222 = vmatmul.bf16.gmra.mxu0 %v1170
      %v1223 = vpop.f32.mrf.mxu0
      %v1224 = vadd.f32 0.0, %v1223
      %v1225 = vpop.f32.mrf.mxu0
      %v1226 = vadd.f32 0.0, %v1225
      %1227 = vdwg.mxu0
      %v1228 = vmul.f32 %v1182, 7.0
      %v1229 = vmul.f32 %v1196, 7.0
      %v1230 = vmul.f32 %v1210, 7.0
      %v1231 = vmul.f32 %v1224, 7.0
      %v1232 = vmul.f32 %v1184, 7.0
      %v1233 = vmul.f32 %v1198, 7.0
      %v1234 = vmul.f32 %v1212, 7.0
      %v1235 = vmul.f32 %v1226, 7.0
      %v1236 = vmul.f32 %v1228, %v1137
      %v1237 = vmul.f32 %v1229, %v1147
      %v1238 = vmul.f32 %v1230, %v1157
      %v1239 = vmul.f32 %v1231, %v1167
      %v1240 = vmul.f32 %v1232, %v1137
      %v1241 = vmul.f32 %v1233, %v1147
      %v1242 = vmul.f32 %v1234, %v1157
      %v1243 = vmul.f32 %v1235, %v1167
      %1244 = vst [vmem:[%s338] sm:$0xff] %v1236
      %1245 = vst [vmem:[%s338 + $0x8] sm:$0xff] %v1237
      %1246 = vst [vmem:[%s338 + $0x10] sm:$0xff] %v1238
      %1247 = vst [vmem:[%s338 + $0x18] sm:$0xff] %v1239
      %1248 = vst [vmem:[%s338 + $0x20] sm:$0xff] %v1240
      %1249 = vst [vmem:[%s338 + $0x28] sm:$0xff] %v1241
      %1250 = vst [vmem:[%s338 + $0x30] sm:$0xff] %v1242
      %1251 = vst [vmem:[%s338 + $0x38] sm:$0xff] %v1243
      %p1252 = scmp.lt.s32.totalorder %s20, 1
      %s1253 = scalar_select %p1252, %s20, 1
      %s1254 = smul.addr %s1253, 8
      %s1255 = smul.addr %s1254, 8
      %s1256 = scalar_lea.vmem %s7, %s1255
      %p1257 = scmp.lt.s32.totalorder %s20, 1
      %s1258 = scalar_select %p1257, %s20, 1
      %s1259 = smul.addr %s1258, 8
      %s1260 = smul.addr %s1259, 8
      %s1261 = scalar_lea.vmem %s8, %s1260
      // Predicated region
      $region49: #{model_forward.1} parent=47 // pred_check
        %p1262 = pneg %p195
      $region50: #{model_forward.1} parent=47 // pred_check_branch
        %1264 = sbr.rel (%p1262) target = $region52
      $region51: #{model_forward.1} parent=47 // pred_region
        _
      $region52: #{model_forward.1} parent=47 // pred_fallthru
        _
      // Predicated region
      $region53: #{model_forward.1} parent=47 // pred_check
        %p1265 = pneg %p221
      $region54: #{model_forward.1} parent=47 // pred_check_branch
        %1267 = sbr.rel (%p1265) target = $region56
      $region55: #{model_forward.1} parent=47 // pred_region
        _
      $region56: #{model_forward.1} parent=47 // pred_fallthru
        _
    $region48: #{model_forward.1} parent=5 // pred_fallthru
      _
    %p1268 = scmp.le.s32.totalorder 2, %s15
    // Predicated region
    $region57: #{model_forward.1} parent=5 // pred_check
      %p1269 = pneg %p1268
    $region58: #{model_forward.1} parent=5 // pred_check_branch
      %1271 = sbr.rel (%p1269) target = $region60
    $region59: #{model_forward.1} parent=5 // pred_region
      %s1272 = ssub.s32 %s15, 2
      // Predicated region
      $region61: #{model_forward.1} parent=59 // pred_check
        %p1273 = pneg %p201
      $region62: #{model_forward.1} parent=59 // pred_check_branch
        %1275 = sbr.rel (%p1273) target = $region64
      $region63: #{model_forward.1} parent=59 // pred_region
        %p1276 = scmp.lt.s32.totalorder %s21, 1
        %s1277 = scalar_select %p1276, %s21, 1
        %s1278 = smul.addr %s1277, 8
        %s1279 = smul.addr %s1278, 8
        %s1280 = scalar_lea.vmem %s7, %s1279
      $region64: #{model_forward.1} parent=59 // pred_fallthru
        _
      // Predicated region
      $region65: #{model_forward.1} parent=59 // pred_check
        %p1281 = pneg %p227
      $region66: #{model_forward.1} parent=59 // pred_check_branch
        %1283 = sbr.rel (%p1281) target = $region68
      $region67: #{model_forward.1} parent=59 // pred_region
        %p1284 = scmp.lt.s32.totalorder %s21, 1
        %s1285 = scalar_select %p1284, %s21, 1
        %s1286 = smul.addr %s1285, 8
        %s1287 = smul.addr %s1286, 8
        %s1288 = scalar_lea.vmem %s8, %s1287
      $region68: #{model_forward.1} parent=59 // pred_fallthru
        _
    $region60: #{model_forward.1} parent=5 // pred_fallthru
      _
  $region6: #{model_forward.1} parent=0 // loop_footer
    %s19 = sadd.s32 1, %s15
  $region7: #{model_forward.1} parent=0 // loop_footer_branch
    %14 = sbr.rel target = $region3
  $region8: #{model_forward.1} parent=0 // loop_exit
    _

</llo_original>
